<compile_context>
chip_gen: v7x
topology: tpu7x:2x2x1
jax: 0.10.0
libtpu: 0.0.40
codegen_flags: <defaults>
</compile_context>

<pallas_src>
import dataclasses
import functools
import math

import jax
import jax.numpy as jnp
from jax.experimental import pallas as pl
from jax.experimental.pallas import tpu as pltpu

_COS_EPS = 1e-8  # torch.nn.functional.cosine_similarity default eps


def _round_up(x, m):
    return ((x + m - 1) // m) * m


def _pad_axis(x, target, axis):
    pad = target - x.shape[axis]
    if pad == 0:
        return x
    widths = [(0, 0)] * x.ndim
    widths[axis] = (0, pad)
    return jnp.pad(x, widths)


def _vmem_capacity_bytes():
    try:
        info = pltpu.get_tpu_info()
        cap = getattr(info, "vmem_capacity_bytes", None)
        if cap:
            return int(cap)
    except Exception:
        pass
    return 64 << 20  # conservative fallback == v7x per-TensorCore VMEM


def _choose_tiles(n_pad, k128, d128, budget):
    """Pick (tk, td) — multiples of 128 — honoring a per-step VMEM budget."""
    # D tiling: keep >= 2 D tiles whenever D allows so the "parallel" grid axis
    # has work for both v7x TensorCores (and megacore on v5e/v6e); cap at 512.
    if d128 >= 256:
        td = min(512, max(128, ((d128 // 2) // 128) * 128))
    else:
        td = d128

    def step_bytes(tk_, td_):
        return (2 * 2 * n_pad * tk_ * 2      # xp/xi bf16 tiles, double-buffered
                + 2 * tk_ * td_ * 2          # W bf16 tile, double-buffered
                + 2 * n_pad * td_ * 4        # f32 feature accumulators
                + 2 * n_pad * 128 * 4)       # fused stats output block (lane pad)

    tk = min(k128, 2048)
    while tk > 256 and step_bytes(tk, td) > budget:
        tk -= 256
    while td > 128 and step_bytes(tk, td) > budget:
        td -= 128
    while tk > 128 and step_bytes(tk, td) > budget:
        tk -= 128

    # Avoid streaming padded-out W rows: prefer a tk that divides k128 exactly
    # if one exists within 2x of the chosen tile size.
    if k128 % tk:
        cand = tk
        while cand >= max(tk // 2, 128):
            if k128 % cand == 0:
                tk = cand
                break
            cand -= 128
    return tk, td


@dataclasses.dataclass(frozen=True, eq=False)
class PreparedWeight:
    """Frozen feature-extractor weight, cast + padded once (hoisted out of the
    per-attack-iteration path — W streaming dominates HBM traffic)."""
    w_pad: jax.Array   # (k_pad, d_pad) bf16, zero padded
    k: int
    d: int
    k_pad: int
    d_pad: int
    tk: int
    td: int


def prepare_feature_weight(weight, *, max_batch=128, tk=None, td=None):
    """One-time prep: choose tiles for this device, cast W to bf16, zero-pad."""
    assert weight.ndim == 2, "weight must be (C*H*W, D)"
    k, d = weight.shape
    k128 = _round_up(k, 128)
    d128 = _round_up(d, 128)
    n_pad = _round_up(max(int(max_batch), 1), 8)
    budget = min(24 << 20, _vmem_capacity_bytes() // 3)   # ~24 MiB v5e/v6e, ~21 MiB v7x
    auto_tk, auto_td = _choose_tiles(n_pad, k128, d128, budget)
    # User overrides are rounded to 256 (v6e/v7x MXU is 2x256^2).
    tk = auto_tk if tk is None else max(128, min(_round_up(tk, 256), k128))
    td = auto_td if td is None else max(128, min(_round_up(td, 256), d128))
    k_pad = _round_up(k, tk)
    d_pad = _round_up(d, td)
    w_pad = _pad_axis(_pad_axis(weight.astype(jnp.bfloat16), k_pad, 0), d_pad, 1)
    return PreparedWeight(w_pad=w_pad, k=k, d=d, k_pad=k_pad, d_pad=d_pad,
                          tk=tk, td=td)


def _feat_cos_kernel(xp_ref, xi_ref, w_ref, stats_ref, accp_ref, acci_ref,
                     *, tk, x_resident):
    """One (d, k) grid step.

    xp_ref / xi_ref : bf16 perturbed / clean rows —
                      (n_pad, k_pad) resident, or (n_pad, tk) streamed per step
    w_ref           : (tk, td) bf16 feature-extractor weight tile
    stats_ref       : (n_pad, 3) f32 fused [dot, ||fp||^2, ||fi||^2] per D tile
    accp/acci_ref   : (n_pad, td) f32 VMEM scratch — feature accumulators over K
    """
    kk = pl.program_id(1)

    @pl.when(kk == 0)
    def _():
        accp_ref[...] = jnp.zeros_like(accp_ref)
        acci_ref[...] = jnp.zeros_like(acci_ref)

    if x_resident:
        off = pl.multiple_of(kk * tk, 128)
        xp = xp_ref[:, pl.ds(off, tk)]
        xi = xi_ref[:, pl.ds(off, tk)]
    else:
        xp = xp_ref[...]
        xi = xi_ref[...]
    w = w_ref[...]
    # Both halves share the same W tile -> W streamed from HBM exactly once.
    accp_ref[...] += jnp.dot(xp, w, preferred_element_type=jnp.float32)
    acci_ref[...] += jnp.dot(xi, w, preferred_element_type=jnp.float32)

    @pl.when(kk == pl.num_programs(1) - 1)
    def _():
        fp = accp_ref[...]
        fi = acci_ref[...]
        dot = jnp.sum(fp * fi, axis=-1, keepdims=True)
        npp = jnp.sum(fp * fp, axis=-1, keepdims=True)
        nii = jnp.sum(fi * fi, axis=-1, keepdims=True)
        col = jax.lax.broadcasted_iota(jnp.int32, (fp.shape[0], 3), 1)
        # Single fused stats block -> one write-back DMA per D tile.
        stats_ref[...] = jnp.where(col == 0, dot,
                                   jnp.where(col == 1, npp, nii))


def targeted_forward(perturbated_images, images, weight, *, tk=None, td=None,
                     x_resident=None):
    """perturbated_images, images: (N, C, H, W); weight: PreparedWeight or
    a raw (C*H*W, D) array (prepared on the fly for one-shot use).

    Returns (N,) f32 = acos(cosine_similarity(feat_p, feat_i))   [Targeted].
    """
    if isinstance(weight, PreparedWeight):
        prep = weight
    else:
        prep = prepare_feature_weight(
            weight, max_batch=perturbated_images.shape[0], tk=tk, td=td)

    assert images.shape == perturbated_images.shape
    n = perturbated_images.shape[0]
    k = math.prod(perturbated_images.shape[1:])
    assert k == prep.k, (k, prep.k)

    n_pad = _round_up(n, 8)
    tk_, td_ = prep.tk, prep.td
    k_pad, d_pad = prep.k_pad, prep.d_pad
    num_k = k_pad // tk_
    num_d = d_pad // td_

    # bf16 inputs halve HBM traffic (native MXU dtype); accumulation stays f32.
    xp = _pad_axis(_pad_axis(
        perturbated_images.reshape(n, k).astype(jnp.bfloat16), n_pad, 0), k_pad, 1)
    xi = _pad_axis(_pad_axis(
        images.reshape(n, k).astype(jnp.bfloat16), n_pad, 0), k_pad, 1)

    cap = _vmem_capacity_bytes()
    limit_cap = min(40 << 20, cap * 5 // 8)       # keep headroom on v7x (64 MiB)
    fixed_bytes = (2 * tk_ * td_ * 2              # W tile, double-buffered
                   + 2 * n_pad * td_ * 4          # f32 feature accumulators
                   + 2 * n_pad * 128 * 4)         # fused stats block
    x_res_bytes = 2 * 2 * n_pad * k_pad * 2       # both inputs, double-buffered
    x_str_bytes = 2 * 2 * n_pad * tk_ * 2
    if x_resident is None:
        # Holding x resident only saves HBM traffic when it would otherwise be
        # re-streamed once per D tile.
        x_resident = (num_d > 1
                      and (x_res_bytes + fixed_bytes) <= min(24 << 20, limit_cap))

    needed = (x_res_bytes if x_resident else x_str_bytes) + fixed_bytes
    vmem_limit = int(min(max(needed + needed // 2, 16 << 20), limit_cap))

    if x_resident:
        x_spec = pl.BlockSpec((n_pad, k_pad), lambda dd, kk: (0, 0))
    else:
        x_spec = pl.BlockSpec((n_pad, tk_), lambda dd, kk: (0, kk))
    w_spec = pl.BlockSpec((tk_, td_), lambda dd, kk: (kk, dd))
    stats_spec = pl.BlockSpec((None, n_pad, 3), lambda dd, kk: (dd, 0, 0))

    x_hbm_bytes = 2 * n_pad * k_pad * 2 * (1 if x_resident else num_d)
    stats = pl.pallas_call(
        functools.partial(_feat_cos_kernel, tk=tk_, x_resident=x_resident),
        out_shape=jax.ShapeDtypeStruct((num_d, n_pad, 3), jnp.float32),
        grid=(num_d, num_k),
        in_specs=[x_spec, x_spec, w_spec],
        out_specs=stats_spec,
        scratch_shapes=[pltpu.VMEM((n_pad, td_), jnp.float32),
                        pltpu.VMEM((n_pad, td_), jnp.float32)],
        compiler_params=pltpu.CompilerParams(
            dimension_semantics=("parallel", "arbitrary"),
            vmem_limit_bytes=vmem_limit,
        ),
        cost_estimate=pl.CostEstimate(
            flops=2 * (2 * n_pad) * k_pad * d_pad,
            transcendentals=0,
            bytes_accessed=k_pad * d_pad * 2 + x_hbm_bytes
            + num_d * n_pad * 3 * 4,
        ),
    )(xp, xi, prep.w_pad)

    # Combine per-D-tile partial sums (tiny) and finish in plain JAX.
    dot = jnp.sum(stats[..., 0], axis=0)[:n]
    np2 = jnp.sum(stats[..., 1], axis=0)[:n]
    ni2 = jnp.sum(stats[..., 2], axis=0)[:n]
    # F.cosine_similarity clamps the product of the norms by eps.
    denom = jnp.sqrt(jnp.maximum(np2 * ni2, _COS_EPS * _COS_EPS))
    cos = jnp.clip(dot / denom, -1.0, 1.0)   # guard acos domain vs fp round-off
    return jnp.arccos(cos)                   # Targeted: raw angles


def untargeted_forward(perturbated_images, images, weight, **kw):
    """Untargeted variant: pi - angles."""
    return jnp.float32(math.pi) - targeted_forward(
        perturbated_images, images, weight, **kw)


def _reference_angles(perturbated_images, images, weight):
    n = perturbated_images.shape[0]
    k = math.prod(perturbated_images.shape[1:])
    xp = perturbated_images.reshape(n, k).astype(jnp.bfloat16)
    xi = images.reshape(n, k).astype(jnp.bfloat16)
    wt = weight.astype(jnp.bfloat16)
    fp = jnp.dot(xp, wt, preferred_element_type=jnp.float32)
    fi = jnp.dot(xi, wt, preferred_element_type=jnp.float32)
    dot = jnp.sum(fp * fi, axis=-1)
    denom = jnp.sqrt(jnp.maximum(
        jnp.sum(fp * fp, axis=-1) * jnp.sum(fi * fi, axis=-1),
        _COS_EPS * _COS_EPS))
    cos = jnp.clip(dot / denom, -1.0, 1.0)
    return jnp.arccos(cos)


if __name__ == "__main__":
    # Small deterministic shapes consistent with the module's forward:
    # batch=2, channels=4, spatial=16x16, feature dim=256.
    N, C, H, W = 2, 4, 16, 16
    D = 256
    K = C * H * W

    key = jax.random.PRNGKey(0)
    k_img, k_pert, k_w = jax.random.split(key, 3)

    images = jax.random.normal(k_img, (N, C, H, W), dtype=jnp.float32)
    perturbated_images = images + 0.05 * jax.random.normal(
        k_pert, (N, C, H, W), dtype=jnp.float32)
    # Deterministic synthetic feature-extractor weight (frozen, as in module).
    weight = 0.02 * jax.random.normal(k_w, (K, D), dtype=jnp.float32)

    # One-time hoisted weight prep (cast + pad). tk=256 forces a multi-step K
    # accumulation even at demo shapes; auto td=128 gives num_d=2 so the
    # parallel D axis has work for both v7x TensorCores.
    prep = prepare_feature_weight(weight, max_batch=N, tk=256)

    out_resident = targeted_forward(perturbated_images, images, prep)
    out_streamed = targeted_forward(perturbated_images, images, prep,
                                    x_resident=False)
    out_untgt = untargeted_forward(perturbated_images, images, prep)
    jax.block_until_ready((out_resident, out_streamed, out_untgt))

    ref = _reference_angles(perturbated_images, images, weight)
    assert out_resident.shape == (N,)
    assert bool(jnp.all(jnp.isfinite(out_resident)))
    assert bool(jnp.allclose(out_resident, ref, atol=5e-3, rtol=5e-3)), (
        out_resident, ref)
    assert bool(jnp.allclose(out_streamed, ref, atol=5e-3, rtol=5e-3)), (
        out_streamed, ref)
    assert bool(jnp.allclose(out_untgt, jnp.float32(math.pi) - ref,
                             atol=5e-3, rtol=5e-3))
    print("KERNEL_OK")
</pallas_src>

<mosaic_0001>
module attributes {stable_mosaic.version = 11 : i64} {
  func.func @_feat_cos_kernel(%arg0: i32, %arg1: i32, %arg2: memref<8x1024xbf16, #tpu.memory_space<vmem>>, %arg3: memref<8x1024xbf16, #tpu.memory_space<vmem>>, %arg4: memref<256x128xbf16, #tpu.memory_space<vmem>>, %arg5: memref<1x8x3xf32, #tpu.memory_space<vmem>>, %arg6: memref<8x128xf32, #tpu.memory_space<vmem>>, %arg7: memref<8x128xf32, #tpu.memory_space<vmem>>) attributes {dimension_semantics = [#tpu.dimension_semantics<parallel>, #tpu.dimension_semantics<arbitrary>], iteration_bounds = array<i64: 2, 4>, scalar_prefetch = 0 : i64, scratch_operands = 2 : i64, tpu.core_type = #tpu.core_type<tc>, window_params = [{pipeline_mode = #tpu.pipeline_mode<synchronous>, transform_indices = @transform_0, window_bounds = array<i64: 8, 1024>}, {pipeline_mode = #tpu.pipeline_mode<synchronous>, transform_indices = @transform_1, window_bounds = array<i64: 8, 1024>}, {transform_indices = @transform_2, window_bounds = array<i64: 256, 128>}, {transform_indices = @transform_3, window_bounds = array<i64: 1, 8, 3>}]} {
    %c0_i32 = arith.constant 0 : i32
    %0 = arith.cmpi eq, %arg1, %c0_i32 : i32
    %1 = arith.extui %0 : i1 to i32
    %c0_i32_0 = arith.constant 0 : i32
    %2 = arith.cmpi ne, %1, %c0_i32_0 : i32
    scf.if %2 {
      %cst_14 = arith.constant 0.000000e+00 : f32
      %21 = vector.broadcast %cst_14 : f32 to vector<8x128xf32>
      %c0_15 = arith.constant 0 : index
      %c0_16 = arith.constant 0 : index
      %22 = vector.load %arg6[%c0_15, %c0_16] : memref<8x128xf32, #tpu.memory_space<vmem>>, vector<8x128xf32>
      tpu.vector_store %arg6[%c0_15, %c0_16], %21 {strides = array<i32>} : memref<8x128xf32, #tpu.memory_space<vmem>>, vector<8x128xf32>,
      %cst_17 = arith.constant 0.000000e+00 : f32
      %23 = vector.broadcast %cst_17 : f32 to vector<8x128xf32>
      %c0_18 = arith.constant 0 : index
      %c0_19 = arith.constant 0 : index
      %24 = vector.load %arg7[%c0_18, %c0_19] : memref<8x128xf32, #tpu.memory_space<vmem>>, vector<8x128xf32>
      tpu.vector_store %arg7[%c0_18, %c0_19], %23 {strides = array<i32>} : memref<8x128xf32, #tpu.memory_space<vmem>>, vector<8x128xf32>,
    } else {
    }
    %c256_i32 = arith.constant 256 : i32
    %3 = arith.muli %arg1, %c256_i32 : i32
    %4 = tpu.assume_multiple %3, 128 : i32
    %c0 = arith.constant 0 : index
    %5 = arith.index_cast %4 : i32 to index
    %6 = vector.load %arg2[%c0, %5] : memref<8x1024xbf16, #tpu.memory_space<vmem>>, vector<8x256xbf16>
    %c0_1 = arith.constant 0 : index
    %7 = arith.index_cast %4 : i32 to index
    %8 = vector.load %arg3[%c0_1, %7] : memref<8x1024xbf16, #tpu.memory_space<vmem>>, vector<8x256xbf16>
    %c0_2 = arith.constant 0 : index
    %c0_3 = arith.constant 0 : index
    %9 = vector.load %arg4[%c0_2, %c0_3] : memref<256x128xbf16, #tpu.memory_space<vmem>>, vector<256x128xbf16>
    %c0_4 = arith.constant 0 : index
    %c0_5 = arith.constant 0 : index
    %10 = vector.load %arg6[%c0_4, %c0_5] : memref<8x128xf32, #tpu.memory_space<vmem>>, vector<8x128xf32>
    %cst = arith.constant dense<0.000000e+00> : vector<8x128xf32>
    %11 = tpu.matmul %6, %9, %cst {dimension_numbers = #tpu.dot_dimension_numbers<[1], [0], [0], [1], [0, 0, 1, 1], [], []>} : vector<8x256xbf16>, vector<256x128xbf16>, vector<8x128xf32> -> vector<8x128xf32>
    %12 = arith.addf %10, %11 : vector<8x128xf32>
    %c0_6 = arith.constant 0 : index
    %c0_7 = arith.constant 0 : index
    %13 = vector.load %arg6[%c0_6, %c0_7] : memref<8x128xf32, #tpu.memory_space<vmem>>, vector<8x128xf32>
    tpu.vector_store %arg6[%c0_6, %c0_7], %12 {strides = array<i32>} : memref<8x128xf32, #tpu.memory_space<vmem>>, vector<8x128xf32>,
    %c0_8 = arith.constant 0 : index
    %c0_9 = arith.constant 0 : index
    %14 = vector.load %arg7[%c0_8, %c0_9] : memref<8x128xf32, #tpu.memory_space<vmem>>, vector<8x128xf32>
    %cst_10 = arith.constant dense<0.000000e+00> : vector<8x128xf32>
    %15 = tpu.matmul %8, %9, %cst_10 {dimension_numbers = #tpu.dot_dimension_numbers<[1], [0], [0], [1], [0, 0, 1, 1], [], []>} : vector<8x256xbf16>, vector<256x128xbf16>, vector<8x128xf32> -> vector<8x128xf32>
    %16 = arith.addf %14, %15 : vector<8x128xf32>
    %c0_11 = arith.constant 0 : index
    %c0_12 = arith.constant 0 : index
    %17 = vector.load %arg7[%c0_11, %c0_12] : memref<8x128xf32, #tpu.memory_space<vmem>>, vector<8x128xf32>
    tpu.vector_store %arg7[%c0_11, %c0_12], %16 {strides = array<i32>} : memref<8x128xf32, #tpu.memory_space<vmem>>, vector<8x128xf32>,
    %c3_i32 = arith.constant 3 : i32
    %18 = arith.cmpi eq, %arg1, %c3_i32 : i32
    %19 = arith.extui %18 : i1 to i32
    %c0_i32_13 = arith.constant 0 : i32
    %20 = arith.cmpi ne, %19, %c0_i32_13 : i32
    scf.if %20 {
      %c0_14 = arith.constant 0 : index
      %c0_15 = arith.constant 0 : index
      %21 = vector.load %arg6[%c0_14, %c0_15] : memref<8x128xf32, #tpu.memory_space<vmem>>, vector<8x128xf32>
      %c0_16 = arith.constant 0 : index
      %c0_17 = arith.constant 0 : index
      %22 = vector.load %arg7[%c0_16, %c0_17] : memref<8x128xf32, #tpu.memory_space<vmem>>, vector<8x128xf32>
      %23 = arith.mulf %21, %22 : vector<8x128xf32>
      %cst_18 = arith.constant dense<0.000000e+00> : vector<8xf32>
      %24 = vector.multi_reduction <add>, %23, %cst_18 [1] : vector<8x128xf32> to vector<8xf32>
      %25 = vector.shape_cast %24 : vector<8xf32> to vector<8x1xf32>
      %26 = arith.mulf %21, %21 : vector<8x128xf32>
      %cst_19 = arith.constant dense<0.000000e+00> : vector<8xf32>
      %27 = vector.multi_reduction <add>, %26, %cst_19 [1] : vector<8x128xf32> to vector<8xf32>
      %28 = vector.shape_cast %27 : vector<8xf32> to vector<8x1xf32>
      %29 = arith.mulf %22, %22 : vector<8x128xf32>
      %cst_20 = arith.constant dense<0.000000e+00> : vector<8xf32>
      %30 = vector.multi_reduction <add>, %29, %cst_20 [1] : vector<8x128xf32> to vector<8xf32>
      %31 = vector.shape_cast %30 : vector<8xf32> to vector<8x1xf32>
      %32 = tpu.iota {dimensions = array<i32: 1>} : vector<8x3xi32>
      %c0_i32_21 = arith.constant 0 : i32
      %33 = vector.broadcast %c0_i32_21 : i32 to vector<8x3xi32>
      %34 = arith.cmpi eq, %32, %33 : vector<8x3xi32>
      %c1_i32 = arith.constant 1 : i32
      %35 = vector.broadcast %c1_i32 : i32 to vector<8x3xi32>
      %36 = arith.cmpi eq, %32, %35 : vector<8x3xi32>
      %37 = vector.shape_cast %28 : vector<8x1xf32> to vector<8x1xf32>
      %38 = vector.broadcast %37 : vector<8x1xf32> to vector<8x3xf32>
      %39 = vector.shape_cast %31 : vector<8x1xf32> to vector<8x1xf32>
      %40 = vector.broadcast %39 : vector<8x1xf32> to vector<8x3xf32>
      %41 = arith.select %36, %38, %40 : vector<8x3xi1>, vector<8x3xf32>
      %42 = vector.shape_cast %25 : vector<8x1xf32> to vector<8x1xf32>
      %43 = vector.broadcast %42 : vector<8x1xf32> to vector<8x3xf32>
      %44 = arith.select %34, %43, %41 : vector<8x3xi1>, vector<8x3xf32>
      %c0_22 = arith.constant 0 : index
      %c0_23 = arith.constant 0 : index
      %c0_24 = arith.constant 0 : index
      %45 = vector.load %arg5[%c0_22, %c0_23, %c0_24] : memref<1x8x3xf32, #tpu.memory_space<vmem>>, vector<1x8x3xf32>
      %46 = vector.shape_cast %45 : vector<1x8x3xf32> to vector<8x3xf32>
      %47 = vector.shape_cast %44 : vector<8x3xf32> to vector<1x8x3xf32>
      tpu.vector_store %arg5[%c0_22, %c0_23, %c0_24], %47 {strides = array<i32>} : memref<1x8x3xf32, #tpu.memory_space<vmem>>, vector<1x8x3xf32>,
    } else {
    }
    return
  }
  func.func @transform_0(%arg0: i32, %arg1: i32) -> (i32, i32) {
    %c0_i32 = arith.constant 0 : i32
    %c0_i32_0 = arith.constant 0 : i32
    %c0_i32_1 = arith.constant 0 : i32
    return %c0_i32, %c0_i32_0 : i32, i32
  }
  func.func @transform_1(%arg0: i32, %arg1: i32) -> (i32, i32) {
    %c0_i32 = arith.constant 0 : i32
    %c0_i32_0 = arith.constant 0 : i32
    %c0_i32_1 = arith.constant 0 : i32
    return %c0_i32, %c0_i32_0 : i32, i32
  }
  func.func @transform_2(%arg0: i32, %arg1: i32) -> (i32, i32) {
    %c0_i32 = arith.constant 0 : i32
    return %arg1, %arg0 : i32, i32
  }
  func.func @transform_3(%arg0: i32, %arg1: i32) -> (i32, i32, i32) {
    %c0_i32 = arith.constant 0 : i32
    %c0_i32_0 = arith.constant 0 : i32
    %c0_i32_1 = arith.constant 0 : i32
    return %arg0, %c0_i32, %c0_i32_0 : i32, i32, i32
  }
}

</mosaic_0001>

<llo_original>
// kernel: tpu_custom_call.1
$region0: #{tpu_custom_call.1}
  #allocation0 [shape = 'u32[]', space=smem, size = 0x4, offset = 0x4, fixed_abs, tag = 'smem constant byte address 0x4 - core index']
  #allocation1 [shape = 'u32[144,128]{1,0:T(1,128)}', space=vmem, size = 0x12000, scoped, tag = 'internal scratch']
  #allocation2 [shape = 'f32[8,128]{1,0:T(8,128)}', space=vmem, size = 0x1000, scoped, tag = 'scratch operand']
  #allocation3 [shape = 'f32[8,128]{1,0:T(8,128)}', space=vmem, size = 0x1000, scoped, tag = 'scratch operand']
  %s0 = inlined_call_operand.hbm [shape: bf16[8,1024], index: 0, kind: input, shape index: {}]
  %s1 = inlined_call_operand.hbm [shape: bf16[8,1024], index: 1, kind: input, shape index: {}]
  %s2 = inlined_call_operand.hbm [shape: bf16[1024,256], index: 2, kind: input, shape index: {}]
  %s3 = inlined_call_operand.vmem [shape: f32[2,8,3], index: 3, kind: output, shape index: {}]
  %s4 = sld [smem:[#allocation0]]
  $region65: #{tpu_custom_call.1} parent=0
    _
  %s6 = ssub.s32 1, %s4
  %s7 = scalar_select 0, %s6, %s4
  $region1: #{tpu_custom_call.1} parent=0
    #allocation4 [shape = 'u8[16384]{0}', space=vmem, size = 0x4000, scoped, tag = 'input window, operand 0, single buffered']
    #allocation5 [shape = 's32[2]{0}', space=sflag, size = 0x8, scoped, tag = 'scoped memory for tpu_custom_call.1']
    #allocation6 [shape = 'u8[16384]{0}', space=vmem, size = 0x4000, scoped, tag = 'input window, operand 1, single buffered']
    #allocation7 [shape = 's32[1]{0}', space=sflag, size = 0x4, scoped, tag = 'scoped memory for tpu_custom_call.1']
    #allocation8 [shape = 'u8[131072]{0}', space=vmem, size = 0x20000, scoped, tag = 'input window, operand 2']
    %8 = vsyncpa [#allocation5], 0
    %9 = vsyncpa [#allocation7], 0
    loop: start=0, step=1, limit=10
    $region2: #{tpu_custom_call.1} parent=1 // loop_pre_header
      _
    $region3: #{tpu_custom_call.1} parent=1 // loop_header
      %s11 = sphi 0, %s15
      %p12 = scmp.ge.s32.totalorder %s11, 10
      %s18 = sphi 0, %s30
      %s19 = sphi 0, %s26
      %s20 = sphi 0, %s18
      %s21 = sphi 0, %s19
      %s22 = sphi 0, %s20
      %s23 = sphi 0, %s21
      %s31 = sphi 0, %s31
      %s33 = sphi 0, %s31
      %s34 = sphi 0, %s33
      %s48 = sphi 0, %s34
      %s52 = sphi 0, %s52
      %s54 = sphi 0, %s52
      %s55 = sphi 0, %s54
      %s69 = sphi 0, %s55
      %s77 = sphi 0, %s79
      %s80 = sphi 0, %s77
      %s81 = sphi 0, %s80
      %s97 = sphi 0, %s81
      %s103 = sphi 0, %s105
      %s106 = sphi 0, %s103
      %s107 = sphi 0, %s106
      %s123 = sphi 0, %s107
    $region4: #{tpu_custom_call.1} parent=1 // loop_header_branch
      %14 = sbr.rel (%p12) target = $region8
    $region5: #{tpu_custom_call.1} parent=1 // loop_body
      %s16 = ssub.s32 %s11, 1
      %s17 = ssub.s32 %s11, 2
      %s24 = sadd.s32 1, %s19
      %p25 = scmp.ge.s32.totalorder %s24, 4
      %s26 = scalar_select %p25, 0, %s24
      %s27 = sadd.s32 1, %s18
      %s28 = scalar_select %p25, %s27, %s18
      %p29 = scmp.ge.s32.totalorder %s28, 2
      %s30 = scalar_select %p29, 0, %s28
      %s32 = sadd.s32 %s31, 1
      %p35 = scmp.eq.s32.totalorder %s11, 7
      %p36 = scmp.ne.s32.totalorder %s31, %s33
      %p37 = scmp.eq.s32.totalorder %s11, 0
      %p38 = por %p36, %p37
      %p39 = scmp.ne.s32.totalorder %s31, %s33
      %p40 = scmp.eq.s32.totalorder %s16, 7
      %p41 = por %p39, %p40
      %p42 = scmp.ne.s32.totalorder %s33, %s34
      %p43 = scmp.eq.s32.totalorder %s16, 0
      %p44 = por %p42, %p43
      %p45 = scmp.ne.s32.totalorder %s33, %s34
      %p46 = scmp.eq.s32.totalorder %s17, 7
      %p47 = por %p45, %p46
      %p49 = scmp.ne.s32.totalorder %s34, %s48
      %p50 = scmp.eq.s32.totalorder %s17, 0
      %p51 = por %p49, %p50
      %s53 = sadd.s32 %s52, 1
      %p56 = scmp.eq.s32.totalorder %s11, 7
      %p57 = scmp.ne.s32.totalorder %s52, %s54
      %p58 = scmp.eq.s32.totalorder %s11, 0
      %p59 = por %p57, %p58
      %p60 = scmp.ne.s32.totalorder %s52, %s54
      %p61 = scmp.eq.s32.totalorder %s16, 7
      %p62 = por %p60, %p61
      %p63 = scmp.ne.s32.totalorder %s54, %s55
      %p64 = scmp.eq.s32.totalorder %s16, 0
      %p65 = por %p63, %p64
      %p66 = scmp.ne.s32.totalorder %s54, %s55
      %p67 = scmp.eq.s32.totalorder %s17, 7
      %p68 = por %p66, %p67
      %p70 = scmp.ne.s32.totalorder %s55, %s69
      %p71 = scmp.eq.s32.totalorder %s17, 0
      %p72 = por %p70, %p71
      %s73 = ssub.s32 %s19, %s26
      %s74 = ssub.s32 %s18, %s30
      %s75 = sor.u32 %s73, %s74
      %p76 = scmp.eq.s32.totalorder %s75, 0
      %s78 = sadd.s32 %s77, 1
      %s79 = scalar_select %p76, %s77, %s78
      %p82 = pneg %p76
      %p83 = scmp.eq.s32.totalorder %s11, 7
      %p84 = por %p82, %p83
      %p85 = scmp.ne.s32.totalorder %s77, %s80
      %p86 = scmp.eq.s32.totalorder %s11, 0
      %p87 = por %p85, %p86
      %p88 = scmp.ne.s32.totalorder %s77, %s80
      %p89 = scmp.eq.s32.totalorder %s16, 7
      %p90 = por %p88, %p89
      %p91 = scmp.ne.s32.totalorder %s80, %s81
      %p92 = scmp.eq.s32.totalorder %s16, 0
      %p93 = por %p91, %p92
      %p94 = scmp.ne.s32.totalorder %s80, %s81
      %p95 = scmp.eq.s32.totalorder %s17, 7
      %p96 = por %p94, %p95
      %p98 = scmp.ne.s32.totalorder %s81, %s97
      %p99 = scmp.eq.s32.totalorder %s17, 0
      %p100 = por %p98, %p99
      %s101 = ssub.s32 %s18, %s30
      %p102 = scmp.eq.s32.totalorder %s101, 0
      %s104 = sadd.s32 %s103, 1
      %s105 = scalar_select %p102, %s103, %s104
      %p108 = pneg %p102
      %p109 = scmp.eq.s32.totalorder %s11, 7
      %p110 = por %p108, %p109
      %p111 = scmp.ne.s32.totalorder %s103, %s106
      %p112 = scmp.eq.s32.totalorder %s11, 0
      %p113 = por %p111, %p112
      %p114 = scmp.ne.s32.totalorder %s103, %s106
      %p115 = scmp.eq.s32.totalorder %s16, 7
      %p116 = por %p114, %p115
      %p117 = scmp.ne.s32.totalorder %s106, %s107
      %p118 = scmp.eq.s32.totalorder %s16, 0
      %p119 = por %p117, %p118
      %p120 = scmp.ne.s32.totalorder %s106, %s107
      %p121 = scmp.eq.s32.totalorder %s17, 7
      %p122 = por %p120, %p121
      %p124 = scmp.ne.s32.totalorder %s107, %s123
      %p125 = scmp.eq.s32.totalorder %s17, 0
      %p126 = por %p124, %p125
      %p127 = scmp.le.s32.totalorder 1, %s11
      %p128 = scmp.lt.s32.totalorder %s11, 9
      %p129 = pnand %p127, %p128
      %p130 = pneg %p129
      // Predicated region
      $region9: #{tpu_custom_call.1} parent=5 // pred_check
        _
      $region10: #{tpu_custom_call.1} parent=5 // pred_check_branch
        %132 = sbr.rel (%p129) target = $region12
      $region11: #{tpu_custom_call.1} parent=5 // pred_region
        %s133 = ssub.s32 %s11, 1
        // Predicated region
        $region13: #{tpu_custom_call.1} parent=11 // pred_check
          %p134 = pneg %p44
        $region14: #{tpu_custom_call.1} parent=11 // pred_check_branch
          %136 = sbr.rel (%p134) target = $region16
        $region15: #{tpu_custom_call.1} parent=11 // pred_region
          %s138 = ssub.s32 512, 512
          %139 = vsyncadd [#allocation5], %s138
          %s141 = sshll.u32 [#allocation4], 4
          %s142 = int_to_ptr.vmem [resolvable:$true] %s141
          %144 = dma.hbm_to_vmem [thread:$0]  %s0, 512, %s142, [#allocation5]
        $region16: #{tpu_custom_call.1} parent=11 // pred_fallthru
          _
        // Predicated region
        $region17: #{tpu_custom_call.1} parent=11 // pred_check
          %p145 = pneg %p65
        $region18: #{tpu_custom_call.1} parent=11 // pred_check_branch
          %147 = sbr.rel (%p145) target = $region20
        $region19: #{tpu_custom_call.1} parent=11 // pred_region
          %s149 = ssub.s32 512, 512
          %150 = vsyncadd [#allocation7], %s149
          %s152 = sshll.u32 [#allocation6], 4
          %s153 = int_to_ptr.vmem [resolvable:$true] %s152
          %155 = dma.hbm_to_vmem [thread:$0]  %s1, 512, %s153, [#allocation7]
        $region20: #{tpu_custom_call.1} parent=11 // pred_fallthru
          _
      $region12: #{tpu_custom_call.1} parent=5 // pred_fallthru
        _
      %p156 = scmp.lt.s32.totalorder %s11, 8
      // Predicated region
      $region21: #{tpu_custom_call.1} parent=5 // pred_check
        %p157 = pneg %p156
      $region22: #{tpu_custom_call.1} parent=5 // pred_check_branch
        %159 = sbr.rel (%p157) target = $region24
      $region23: #{tpu_custom_call.1} parent=5 // pred_region
        // Predicated region
        $region25: #{tpu_custom_call.1} parent=23 // pred_check
          %p160 = pneg %p87
        $region26: #{tpu_custom_call.1} parent=23 // pred_check_branch
          %162 = sbr.rel (%p160) target = $region28
        $region27: #{tpu_custom_call.1} parent=23 // pred_region
          %s163 = sand.u32 %s11, 1
          %s164 = scalar_lea.sflag [#allocation5], %s163
          %s165 = sand.u32 %s77, 1
          %s166 = smul.addr %s165, 128
          %s167 = scalar_lea.vmem [#allocation8], %s166
          %s168 = smul.u32 32, %s19
          %s170 = ssub.s32 2048, 2048
          %171 = vsyncadd %s164, %s170
          %s172 = smul.addr %s168, 2
          %s173 = sadd.s32 %s18, %s172
          %s174 = smul.addr %s173, 64
          %s175 = scalar_lea.hbm %s2, %s174
          %s176 = sshll.u32 %s167, 4
          %s177 = int_to_ptr.vmem [resolvable:$true] %s176
          %182 = dma.hbm_to_vmem [thread:$0]  %s175, 2048, %s177, %s164, 128, 64, 4
        $region28: #{tpu_custom_call.1} parent=23 // pred_fallthru
          _
      $region24: #{tpu_custom_call.1} parent=5 // pred_fallthru
        _
      %p183 = scmp.le.s32.totalorder 1, %s11
      %p184 = scmp.lt.s32.totalorder %s11, 9
      %p185 = pnand %p183, %p184
      %p186 = pneg %p185
      // Predicated region
      $region29: #{tpu_custom_call.1} parent=5 // pred_check
        _
      $region30: #{tpu_custom_call.1} parent=5 // pred_check_branch
        %188 = sbr.rel (%p185) target = $region32
      $region31: #{tpu_custom_call.1} parent=5 // pred_region
        %s189 = ssub.s32 %s11, 1
        // Predicated region
        $region33: #{tpu_custom_call.1} parent=31 // pred_check
          %p190 = pneg %p44
        $region34: #{tpu_custom_call.1} parent=31 // pred_check_branch
          %192 = sbr.rel (%p190) target = $region36
        $region35: #{tpu_custom_call.1} parent=31 // pred_region
          %193 = dma.done [#allocation5], 512
        $region36: #{tpu_custom_call.1} parent=31 // pred_fallthru
          _
        // Predicated region
        $region37: #{tpu_custom_call.1} parent=31 // pred_check
          %p194 = pneg %p65
        $region38: #{tpu_custom_call.1} parent=31 // pred_check_branch
          %196 = sbr.rel (%p194) target = $region40
        $region39: #{tpu_custom_call.1} parent=31 // pred_region
          %197 = dma.done [#allocation7], 512
        $region40: #{tpu_custom_call.1} parent=31 // pred_fallthru
          _
        %s198 = sand.u32 %s16, 1
        %s199 = scalar_lea.sflag [#allocation5], %s198
        %s200 = sand.u32 %s80, 1
        %s201 = smul.addr %s200, 128
        %s202 = scalar_lea.vmem [#allocation8], %s201
        // Predicated region
        $region41: #{tpu_custom_call.1} parent=31 // pred_check
          %p203 = pneg %p93
        $region42: #{tpu_custom_call.1} parent=31 // pred_check_branch
          %205 = sbr.rel (%p203) target = $region44
        $region43: #{tpu_custom_call.1} parent=31 // pred_region
          %206 = dma.done %s199, 2048
        $region44: #{tpu_custom_call.1} parent=31 // pred_fallthru
          _
        %p207 = pneg %p44
        %p208 = pneg %p41
        %p209 = pneg %p65
        %p210 = pneg %p62
        %s211 = sand.u32 %s16, 1
        %s212 = scalar_lea.sflag [#allocation5], %s211
        %s213 = sand.u32 %s80, 1
        %s214 = smul.addr %s213, 128
        %s215 = scalar_lea.vmem [#allocation8], %s214
        %p216 = pneg %p93
        %p217 = pneg %p90
        %p218 = pneg %p119
        %p219 = pneg %p116
        %p220 = scmp.lt.s32.totalorder %s20, 1
        %s221 = scalar_select %p220, %s20, 1
        %s222 = smul.addr %s221, 8
        %s223 = scalar_lea.vmem %s3, %s222
        %s224 = smul.u32 32, %s21
        %p225 = scmp.lt.s32.totalorder %s20, 1
        %s226 = scalar_select %p225, %s20, 1
        %s227 = smul.addr %s226, 8
        %s228 = scalar_lea.vmem %s3, %s227
        %p230 = scmp.eq.s32.totalorder %s21, 0
        // Predicated region
        $region45: #{tpu_custom_call.1} parent=31 // pred_check
          %p231 = pneg %p230
        $region46: #{tpu_custom_call.1} parent=31 // pred_check_branch
          %233 = sbr.rel (%p231) target = $region48
        $region47: #{tpu_custom_call.1} parent=31 // pred_region
          %234 = vst [vmem:[#allocation2] sm:$0xff] 0.0
          %235 = vst [vmem:[#allocation3] sm:$0xff] 0.0
        $region48: #{tpu_custom_call.1} parent=31 // pred_fallthru
          _
        %s236 = smul.u32 %s21, 256
        %s237 = sshra.s32 %s236, 7
        %s238 = sand.u32 %s236, 127
        %s239 = smul.addr %s237, 4
        %s240 = scalar_lea.vmem [#allocation4], %s239
        %v241 = vld [vmem:[%s240] sm:$0xff]
        %s242 = smul.addr %s237, 4
        %s243 = scalar_lea.vmem [#allocation6], %s242
        %v244 = vld [vmem:[%s243] sm:$0xff]
        %v245 = vld [vmem:[%s202] sm:$0xf]
        %v246 = vld [vmem:[%s202 + $0x4] sm:$0xf]
        %v247 = vld [vmem:[%s202 + $0x8] sm:$0xf]
        %v248 = vld [vmem:[%s202 + $0xc] sm:$0xf]
        %v249 = vld [vmem:[%s202 + $0x10] sm:$0xf]
        %v250 = vld [vmem:[%s202 + $0x14] sm:$0xf]
        %v251 = vld [vmem:[%s202 + $0x18] sm:$0xf]
        %v252 = vld [vmem:[%s202 + $0x1c] sm:$0xf]
        %v253 = vld [vmem:[%s202 + $0x20] sm:$0xf]
        %v254 = vld [vmem:[%s202 + $0x24] sm:$0xf]
        %v255 = vld [vmem:[%s202 + $0x28] sm:$0xf]
        %v256 = vld [vmem:[%s202 + $0x2c] sm:$0xf]
        %v257 = vld [vmem:[%s202 + $0x30] sm:$0xf]
        %v258 = vld [vmem:[%s202 + $0x34] sm:$0xf]
        %v259 = vld [vmem:[%s202 + $0x38] sm:$0xf]
        %v260 = vld [vmem:[%s202 + $0x3c] sm:$0xf]
        %v261 = vld [vmem:[%s202 + $0x40] sm:$0xf]
        %v262 = vld [vmem:[%s202 + $0x44] sm:$0xf]
        %v263 = vld [vmem:[%s202 + $0x48] sm:$0xf]
        %v264 = vld [vmem:[%s202 + $0x4c] sm:$0xf]
        %v265 = vld [vmem:[%s202 + $0x50] sm:$0xf]
        %v266 = vld [vmem:[%s202 + $0x54] sm:$0xf]
        %v267 = vld [vmem:[%s202 + $0x58] sm:$0xf]
        %v268 = vld [vmem:[%s202 + $0x5c] sm:$0xf]
        %v269 = vld [vmem:[%s202 + $0x60] sm:$0xf]
        %v270 = vld [vmem:[%s202 + $0x64] sm:$0xf]
        %v271 = vld [vmem:[%s202 + $0x68] sm:$0xf]
        %v272 = vld [vmem:[%s202 + $0x6c] sm:$0xf]
        %v273 = vld [vmem:[%s202 + $0x70] sm:$0xf]
        %v274 = vld [vmem:[%s202 + $0x74] sm:$0xf]
        %v275 = vld [vmem:[%s202 + $0x78] sm:$0xf]
        %v276 = vld [vmem:[%s202 + $0x7c] sm:$0xf]
        %v277 = vld [vmem:[#allocation2] sm:$0xff]
        %v279 = vunpack.c.l.b16 %v241
        %v280 = vunpack.c.h.b16 %v241
        %v281 = vpack.c.b16 %v279, %v279
        %v282 = vpack.c.b16 %v280, %v280
        %v317 = vunpack.c.l.b16 %v245
        %v318 = vunpack.c.l.b16 %v246
        %v319 = vunpack.c.l.b16 %v247
        %v320 = vunpack.c.l.b16 %v248
        %v321 = vunpack.c.l.b16 %v249
        %v322 = vunpack.c.l.b16 %v250
        %v323 = vunpack.c.l.b16 %v251
        %v324 = vunpack.c.l.b16 %v252
        %v325 = vunpack.c.l.b16 %v253
        %v326 = vunpack.c.l.b16 %v254
        %v327 = vunpack.c.l.b16 %v255
        %v328 = vunpack.c.l.b16 %v256
        %v329 = vunpack.c.l.b16 %v257
        %v330 = vunpack.c.l.b16 %v258
        %v331 = vunpack.c.l.b16 %v259
        %v332 = vunpack.c.l.b16 %v260
        %v333 = vunpack.c.l.b16 %v261
        %v334 = vunpack.c.l.b16 %v262
        %v335 = vunpack.c.l.b16 %v263
        %v336 = vunpack.c.l.b16 %v264
        %v337 = vunpack.c.l.b16 %v265
        %v338 = vunpack.c.l.b16 %v266
        %v339 = vunpack.c.l.b16 %v267
        %v340 = vunpack.c.l.b16 %v268
        %v341 = vunpack.c.l.b16 %v269
        %v342 = vunpack.c.l.b16 %v270
        %v343 = vunpack.c.l.b16 %v271
        %v344 = vunpack.c.l.b16 %v272
        %v345 = vunpack.c.l.b16 %v273
        %v346 = vunpack.c.l.b16 %v274
        %v347 = vunpack.c.l.b16 %v275
        %v348 = vunpack.c.l.b16 %v276
        %v349 = vpack.c.b16 %v318, %v317
        %v350 = vpack.c.b16 %v320, %v319
        %v351 = vpack.c.b16 %v322, %v321
        %v352 = vpack.c.b16 %v324, %v323
        %v353 = vpack.c.b16 %v326, %v325
        %v354 = vpack.c.b16 %v328, %v327
        %v355 = vpack.c.b16 %v330, %v329
        %v356 = vpack.c.b16 %v332, %v331
        %v357 = vpack.c.b16 %v334, %v333
        %v358 = vpack.c.b16 %v336, %v335
        %v359 = vpack.c.b16 %v338, %v337
        %v360 = vpack.c.b16 %v340, %v339
        %v361 = vpack.c.b16 %v342, %v341
        %v362 = vpack.c.b16 %v344, %v343
        %v363 = vpack.c.b16 %v346, %v345
        %v364 = vpack.c.b16 %v348, %v347
        %381 = vmatprep.subr.bf16.mxu0 0
        %382 = vmatpush1.bf16.msra.mxu0 %v349
        %383 = vmatprep.subr.bf16.mxu0 0
        %384 = vmatpush1.bf16.msra.mxu0 %v350
        %385 = vmatprep.subr.bf16.mxu0 0
        %386 = vmatpush1.bf16.msra.mxu0 %v351
        %387 = vmatprep.subr.bf16.mxu0 0
        %388 = vmatpush1.bf16.msra.mxu0 %v352
        %389 = vmatprep.subr.bf16.mxu0 0
        %390 = vmatpush1.bf16.msra.mxu0 %v353
        %391 = vmatprep.subr.bf16.mxu0 0
        %392 = vmatpush1.bf16.msra.mxu0 %v354
        %393 = vmatprep.subr.bf16.mxu0 0
        %394 = vmatpush1.bf16.msra.mxu0 %v355
        %395 = vmatprep.subr.bf16.mxu0 0
        %396 = vmatpush1.bf16.msra.mxu0 %v356
        %397 = vmatprep.subr.bf16.mxu0 0
        %398 = vmatpush1.bf16.msra.mxu0 %v357
        %399 = vmatprep.subr.bf16.mxu0 0
        %400 = vmatpush1.bf16.msra.mxu0 %v358
        %401 = vmatprep.subr.bf16.mxu0 0
        %402 = vmatpush1.bf16.msra.mxu0 %v359
        %403 = vmatprep.subr.bf16.mxu0 0
        %404 = vmatpush1.bf16.msra.mxu0 %v360
        %405 = vmatprep.subr.bf16.mxu0 0
        %406 = vmatpush1.bf16.msra.mxu0 %v361
        %407 = vmatprep.subr.bf16.mxu0 0
        %408 = vmatpush1.bf16.msra.mxu0 %v362
        %409 = vmatprep.subr.bf16.mxu0 0
        %410 = vmatpush1.bf16.msra.mxu0 %v363
        %411 = vmatprep.subr.bf16.mxu0 0
        %412 = vmatpush1.bf16.msra.mxu0 %v364
        %413 = vmatprep.mubr.bf16.mxu0 %v282
        %414 = vmatmul.mubr.bf16.gmra.mrb[0].mxu0 %v281
        %v415 = vpop.f32.mrb[0].mxu0
        %v416 = vadd.f32 0.0, %v415
        %v417 = vpop.f32.mrb[0].mxu0
        %v418 = vpop.f32.mrb[0].mxu0
        %v419 = vpop.f32.mrb[0].mxu0
        %420 = vdwg.mxu0
        %v421 = vadd.f32 %v277, %v416
        %422 = vst [vmem:[#allocation2] sm:$0xff] %v421
        %v423 = vld [vmem:[#allocation3] sm:$0xff]
        %v425 = vunpack.c.l.b16 %v244
        %v426 = vunpack.c.h.b16 %v244
        %v427 = vpack.c.b16 %v425, %v425
        %v428 = vpack.c.b16 %v426, %v426
        %431 = vmatprep.subr.bf16.mxu0 0
        %432 = vmatpush1.bf16.msra.mxu0 %v349
        %433 = vmatprep.subr.bf16.mxu0 0
        %434 = vmatpush1.bf16.msra.mxu0 %v350
        %435 = vmatprep.subr.bf16.mxu0 0
        %436 = vmatpush1.bf16.msra.mxu0 %v351
        %437 = vmatprep.subr.bf16.mxu0 0
        %438 = vmatpush1.bf16.msra.mxu0 %v352
        %439 = vmatprep.subr.bf16.mxu0 0
        %440 = vmatpush1.bf16.msra.mxu0 %v353
        %441 = vmatprep.subr.bf16.mxu0 0
        %442 = vmatpush1.bf16.msra.mxu0 %v354
        %443 = vmatprep.subr.bf16.mxu0 0
        %444 = vmatpush1.bf16.msra.mxu0 %v355
        %445 = vmatprep.subr.bf16.mxu0 0
        %446 = vmatpush1.bf16.msra.mxu0 %v356
        %447 = vmatprep.subr.bf16.mxu0 0
        %448 = vmatpush1.bf16.msra.mxu0 %v357
        %449 = vmatprep.subr.bf16.mxu0 0
        %450 = vmatpush1.bf16.msra.mxu0 %v358
        %451 = vmatprep.subr.bf16.mxu0 0
        %452 = vmatpush1.bf16.msra.mxu0 %v359
        %453 = vmatprep.subr.bf16.mxu0 0
        %454 = vmatpush1.bf16.msra.mxu0 %v360
        %455 = vmatprep.subr.bf16.mxu0 0
        %456 = vmatpush1.bf16.msra.mxu0 %v361
        %457 = vmatprep.subr.bf16.mxu0 0
        %458 = vmatpush1.bf16.msra.mxu0 %v362
        %459 = vmatprep.subr.bf16.mxu0 0
        %460 = vmatpush1.bf16.msra.mxu0 %v363
        %461 = vmatprep.subr.bf16.mxu0 0
        %462 = vmatpush1.bf16.msra.mxu0 %v364
        %463 = vmatprep.mubr.bf16.mxu0 %v428
        %464 = vmatmul.mubr.bf16.gmra.mrb[0].mxu0 %v427
        %v465 = vpop.f32.mrb[0].mxu0
        %v466 = vadd.f32 0.0, %v465
        %v467 = vpop.f32.mrb[0].mxu0
        %v468 = vpop.f32.mrb[0].mxu0
        %v469 = vpop.f32.mrb[0].mxu0
        %470 = vdwg.mxu0
        %v471 = vadd.f32 %v423, %v466
        %472 = vst [vmem:[#allocation3] sm:$0xff] %v471
        %p473 = scmp.eq.s32.totalorder %s21, 3
        // Predicated region
        $region49: #{tpu_custom_call.1} parent=31 // pred_check
          %p474 = pneg %p473
        $region50: #{tpu_custom_call.1} parent=31 // pred_check_branch
          %476 = sbr.rel (%p474) target = $region52
        $region51: #{tpu_custom_call.1} parent=31 // pred_region
          %v477 = vld [vmem:[#allocation2] sm:$0xff]
          %v478 = vld [vmem:[#allocation3] sm:$0xff]
          %v479 = vmul.f32 %v477, %v478
          %480 = vadd.xlane.f32.xlu0 %v479
          %v481 = vpop.xlane.xlu0 %480
          %v482 = vmul.f32 %v477, %v477
          %483 = vadd.xlane.f32.xlu0 %v482
          %v484 = vpop.xlane.xlu0 %483
          %v485 = vmul.f32 %v478, %v478
          %486 = vadd.xlane.f32.xlu0 %v485
          %v487 = vpop.xlane.xlu0 %486
          %v488 = vlaneseq
          %v489 = vand.u32 %v488, 127
          %vm490 = vcmp.eq.s32.totalorder %v489, 0
          %vm491 = vcmp.eq.s32.totalorder %v489, 1
          %v492 = vsel %vm491, %v484, %v487
          %v493 = vsel %vm490, %v481, %v492
          %vm494 = vcmask 23552
          %495 = vst.msk [vmem:[%s228] sm:$0xff] %vm494, %v493
        $region52: #{tpu_custom_call.1} parent=31 // pred_fallthru
          _
        %p496 = scmp.lt.s32.totalorder %s20, 1
        %s497 = scalar_select %p496, %s20, 1
        %s498 = smul.addr %s497, 8
        %s499 = scalar_lea.vmem %s3, %s498
        // Predicated region
        $region53: #{tpu_custom_call.1} parent=31 // pred_check
          %p500 = pneg %p116
        $region54: #{tpu_custom_call.1} parent=31 // pred_check_branch
          %502 = sbr.rel (%p500) target = $region56
        $region55: #{tpu_custom_call.1} parent=31 // pred_region
          _
        $region56: #{tpu_custom_call.1} parent=31 // pred_fallthru
          _
      $region32: #{tpu_custom_call.1} parent=5 // pred_fallthru
        _
      %p503 = scmp.le.s32.totalorder 2, %s11
      // Predicated region
      $region57: #{tpu_custom_call.1} parent=5 // pred_check
        %p504 = pneg %p503
      $region58: #{tpu_custom_call.1} parent=5 // pred_check_branch
        %506 = sbr.rel (%p504) target = $region60
      $region59: #{tpu_custom_call.1} parent=5 // pred_region
        %s507 = ssub.s32 %s11, 2
        // Predicated region
        $region61: #{tpu_custom_call.1} parent=59 // pred_check
          %p508 = pneg %p122
        $region62: #{tpu_custom_call.1} parent=59 // pred_check_branch
          %510 = sbr.rel (%p508) target = $region64
        $region63: #{tpu_custom_call.1} parent=59 // pred_region
          %p511 = scmp.lt.s32.totalorder %s22, 1
          %s512 = scalar_select %p511, %s22, 1
          %s513 = smul.addr %s512, 8
          %s514 = scalar_lea.vmem %s3, %s513
        $region64: #{tpu_custom_call.1} parent=59 // pred_fallthru
          _
      $region60: #{tpu_custom_call.1} parent=5 // pred_fallthru
        _
    $region6: #{tpu_custom_call.1} parent=1 // loop_footer
      %s15 = sadd.s32 1, %s11
    $region7: #{tpu_custom_call.1} parent=1 // loop_footer_branch
      %10 = sbr.rel target = $region3
    $region8: #{tpu_custom_call.1} parent=1 // loop_exit
      _
    %515 = vsyncpa [#allocation5], 1
    %s516 = scalar_lea.sflag [#allocation5], 1
    %517 = vsyncpa %s516, 1
    %518 = vsyncpa [#allocation7], 1

</llo_original>
